<compile_context>
chip_gen: v7x
topology: tpu7x:2x2x1
jax: 0.10.0
libtpu: 0.0.40
codegen_flags: <defaults>
</compile_context>

<pallas_src>
import functools

import jax
import jax.numpy as jnp
from jax.experimental import pallas as pl
from jax.experimental.pallas import tpu as pltpu


def _rows_per_step(dtype):
    """Row-batch size matching the native sublane tile for the dtype."""
    itemsize = jnp.dtype(dtype).itemsize
    return max(8, 32 // max(itemsize, 1))  # f32 -> 8, bf16 -> 16, int8 -> 32


def _vmem_capacity_bytes():
    """Per-TensorCore VMEM capacity; conservative fallback (v7x = 64 MiB)."""
    try:
        return int(pltpu.get_tpu_info().vmem_capacity_bytes)
    except Exception:
        return 64 * 1024 * 1024


def _gather_vmem_kernel(idx_ref, table_ref, out_ref, *, rows):
    """Gather `rows` rows of a VMEM-resident table into one (rows, H) block.

    idx_ref:   SMEM scalar-prefetch ref with the (padded) flat user ids.
    table_ref: (N, H) full embedding table, resident in VMEM across the grid.
    out_ref:   (rows, H) output block for this grid step.
    """
    base = pl.program_id(0) * rows
    for r in range(rows):  # statically unrolled; rows is small (8/16/32)
        row_id = idx_ref[base + r]
        out_ref[pl.ds(r, 1), :] = table_ref[pl.ds(row_id, 1), :]


def _gather_hbm_kernel(idx_ref, table_hbm, out_ref, scratch, sem, *, rows):
    """Gather `rows` rows straight from HBM with `rows` DMAs kept in flight.

    table_hbm: raw (N, H) HBM ref (memory_space=pl.ANY).
    scratch:   (rows, H) VMEM staging buffer.
    sem:       (rows,) DMA semaphores, one per in-flight row copy.
    """
    base = pl.program_id(0) * rows

    def _copy(r):
        row_id = idx_ref[base + r]
        return pltpu.make_async_copy(
            table_hbm.at[pl.ds(row_id, 1), :],
            scratch.at[pl.ds(r, 1), :],
            sem.at[r],
        )

    for r in range(rows):          # issue all row DMAs (kept in flight)
        _copy(r).start()
    for r in range(rows):          # wait for all of them
        _copy(r).wait()
    out_ref[...] = scratch[...]    # one dense (rows, H) store


def sasrec_user_embeddings(user_ids, table, *, force_hbm_gather=False):
    """Equivalent of SasrecUserEmbeddings.forward(user_ids).

    user_ids: int array of arbitrary shape.
    table:    (num_users, hidden) embedding table.
    returns:  user_ids.shape + (hidden,) array of embeddings.
    """
    orig_shape = user_ids.shape
    N, H = table.shape
    flat_ids = user_ids.reshape(-1).astype(jnp.int32)
    B = flat_ids.shape[0]

    if B == 0:  # empty batch: nothing to gather
        return jnp.zeros(orig_shape + (H,), dtype=table.dtype)

    # Cheap insurance: an out-of-range id would otherwise drive an OOB
    # data-dependent DMA / dynamic slice.
    flat_ids = jnp.clip(flat_ids, 0, N - 1)

    rows = _rows_per_step(table.dtype)
    pad = (-B) % rows
    if pad:
        flat_ids = jnp.concatenate(
            [flat_ids, jnp.zeros((pad,), dtype=jnp.int32)]
        )
    b_pad = B + pad
    grid = (b_pad // rows,)

    itemsize = jnp.dtype(table.dtype).itemsize
    table_bytes = N * H * itemsize
    capacity = _vmem_capacity_bytes()
    # Resident-table fast path only if the table fits with ample headroom
    # (output double-buffers, other VMEM users).  64 MiB cap matters on v7x.
    use_resident = (not force_hbm_gather) and (table_bytes <= capacity // 2)

    out_spec = pl.BlockSpec((rows, H), lambda i, idx_ref: (i, 0))
    out_shape = jax.ShapeDtypeStruct((b_pad, H), table.dtype)

    # Raise the scoped VMEM limit only when the working set needs it
    # (v5e default scoped limit is 16 MiB of the 128 MiB physical).
    working_set = 4 * rows * H * itemsize + (2 << 20)
    if use_resident:
        working_set += table_bytes
    cp_kwargs = dict(dimension_semantics=("parallel",))
    if working_set > (16 << 20):
        cp_kwargs["vmem_limit_bytes"] = min(working_set, capacity)
    compiler_params = pltpu.CompilerParams(**cp_kwargs)

    if use_resident:
        grid_spec = pltpu.PrefetchScalarGridSpec(
            num_scalar_prefetch=1,  # flat_ids lands in SMEM
            grid=grid,
            in_specs=[
                # Whole table as a single VMEM block; constant block index
                # across the grid -> DMA'd from HBM only once.
                pl.BlockSpec((N, H), lambda i, idx_ref: (0, 0)),
            ],
            out_specs=out_spec,
        )
        kernel = functools.partial(_gather_vmem_kernel, rows=rows)
    else:
        grid_spec = pltpu.PrefetchScalarGridSpec(
            num_scalar_prefetch=1,
            grid=grid,
            in_specs=[
                pl.BlockSpec(memory_space=pl.ANY),  # table stays in HBM
            ],
            out_specs=out_spec,
            scratch_shapes=[
                pltpu.VMEM((rows, H), table.dtype),
                pltpu.SemaphoreType.DMA((rows,)),
            ],
        )
        kernel = functools.partial(_gather_hbm_kernel, rows=rows)

    out = pl.pallas_call(
        kernel,
        grid_spec=grid_spec,
        out_shape=out_shape,
        compiler_params=compiler_params,
    )(flat_ids, table)

    if pad:
        out = out[:B]
    return out.reshape(orig_shape + (H,))


if __name__ == "__main__":
    key = jax.random.PRNGKey(0)
    k_table, k_ids, k_ids2 = jax.random.split(key, 3)

    num_users = 64
    sasrec_hidden_units = 128   # hidden dim (lane-aligned)
    batch = 8

    # Deterministic stand-in for the pre-trained SASRec user-embedding table.
    user_weights = jax.random.normal(
        k_table, (num_users, sasrec_hidden_units), dtype=jnp.float32
    )
    user_ids = jax.random.randint(k_ids, (batch,), 0, num_users, dtype=jnp.int32)

    # Path 1: small table -> VMEM-resident gather.
    out = sasrec_user_embeddings(user_ids, user_weights)
    out = jax.block_until_ready(out)
    ref = jnp.take(user_weights, user_ids, axis=0)
    assert out.shape == (batch, sasrec_hidden_units), out.shape
    assert out.dtype == jnp.float32
    assert jnp.array_equal(out, ref), "VMEM-resident gather mismatch vs. reference"

    # Path 2: force the HBM manual-DMA gather (ragged batch exercises padding).
    user_ids2 = jax.random.randint(
        k_ids2, (3, 7), 0, num_users, dtype=jnp.int32
    )
    out2 = sasrec_user_embeddings(user_ids2, user_weights, force_hbm_gather=True)
    out2 = jax.block_until_ready(out2)
    ref2 = jnp.take(user_weights, user_ids2.reshape(-1), axis=0).reshape(
        3, 7, sasrec_hidden_units
    )
    assert out2.shape == (3, 7, sasrec_hidden_units), out2.shape
    assert jnp.array_equal(out2, ref2), "HBM manual-DMA gather mismatch vs. reference"

    print("KERNEL_OK")
</pallas_src>

<mosaic_0001>
module attributes {stable_mosaic.version = 11 : i64} {
  func.func @_gather_vmem_kernel(%arg0: i32, %arg1: memref<8xi32, #tpu.memory_space<smem>>, %arg2: memref<64x128xf32, #tpu.memory_space<vmem>>, %arg3: memref<8x128xf32, #tpu.memory_space<vmem>>) attributes {dimension_semantics = [#tpu.dimension_semantics<parallel>], iteration_bounds = array<i64: 1>, scalar_prefetch = 1 : i64, scratch_operands = 0 : i64, tpu.core_type = #tpu.core_type<tc>, window_params = [{pipeline_mode = #tpu.pipeline_mode<synchronous>, transform_indices = @transform_0, window_bounds = array<i64: 64, 128>}, {transform_indices = @transform_1, window_bounds = array<i64: 8, 128>}]} {
    %c8_i32 = arith.constant 8 : i32
    %0 = arith.muli %arg0, %c8_i32 : i32
    %c0_i32 = arith.constant 0 : i32
    %1 = arith.addi %0, %c0_i32 : i32
    %2 = arith.index_cast %1 : i32 to index
    %3 = memref.load %arg1[%2] : memref<8xi32, #tpu.memory_space<smem>>
    %4 = arith.index_cast %3 : i32 to index
    %c0 = arith.constant 0 : index
    %5 = vector.load %arg2[%4, %c0] : memref<64x128xf32, #tpu.memory_space<vmem>>, vector<1x128xf32>
    %c0_0 = arith.constant 0 : index
    %c0_1 = arith.constant 0 : index
    %6 = vector.load %arg3[%c0_0, %c0_1] : memref<8x128xf32, #tpu.memory_space<vmem>>, vector<1x128xf32>
    tpu.vector_store %arg3[%c0_0, %c0_1], %5 {strides = array<i32>} : memref<8x128xf32, #tpu.memory_space<vmem>>, vector<1x128xf32>,
    %c1_i32 = arith.constant 1 : i32
    %7 = arith.addi %0, %c1_i32 : i32
    %8 = arith.index_cast %7 : i32 to index
    %9 = memref.load %arg1[%8] : memref<8xi32, #tpu.memory_space<smem>>
    %10 = arith.index_cast %9 : i32 to index
    %c0_2 = arith.constant 0 : index
    %11 = vector.load %arg2[%10, %c0_2] : memref<64x128xf32, #tpu.memory_space<vmem>>, vector<1x128xf32>
    %c1 = arith.constant 1 : index
    %c0_3 = arith.constant 0 : index
    %12 = vector.load %arg3[%c1, %c0_3] : memref<8x128xf32, #tpu.memory_space<vmem>>, vector<1x128xf32>
    tpu.vector_store %arg3[%c1, %c0_3], %11 {strides = array<i32>} : memref<8x128xf32, #tpu.memory_space<vmem>>, vector<1x128xf32>,
    %c2_i32 = arith.constant 2 : i32
    %13 = arith.addi %0, %c2_i32 : i32
    %14 = arith.index_cast %13 : i32 to index
    %15 = memref.load %arg1[%14] : memref<8xi32, #tpu.memory_space<smem>>
    %16 = arith.index_cast %15 : i32 to index
    %c0_4 = arith.constant 0 : index
    %17 = vector.load %arg2[%16, %c0_4] : memref<64x128xf32, #tpu.memory_space<vmem>>, vector<1x128xf32>
    %c2 = arith.constant 2 : index
    %c0_5 = arith.constant 0 : index
    %18 = vector.load %arg3[%c2, %c0_5] : memref<8x128xf32, #tpu.memory_space<vmem>>, vector<1x128xf32>
    tpu.vector_store %arg3[%c2, %c0_5], %17 {strides = array<i32>} : memref<8x128xf32, #tpu.memory_space<vmem>>, vector<1x128xf32>,
    %c3_i32 = arith.constant 3 : i32
    %19 = arith.addi %0, %c3_i32 : i32
    %20 = arith.index_cast %19 : i32 to index
    %21 = memref.load %arg1[%20] : memref<8xi32, #tpu.memory_space<smem>>
    %22 = arith.index_cast %21 : i32 to index
    %c0_6 = arith.constant 0 : index
    %23 = vector.load %arg2[%22, %c0_6] : memref<64x128xf32, #tpu.memory_space<vmem>>, vector<1x128xf32>
    %c3 = arith.constant 3 : index
    %c0_7 = arith.constant 0 : index
    %24 = vector.load %arg3[%c3, %c0_7] : memref<8x128xf32, #tpu.memory_space<vmem>>, vector<1x128xf32>
    tpu.vector_store %arg3[%c3, %c0_7], %23 {strides = array<i32>} : memref<8x128xf32, #tpu.memory_space<vmem>>, vector<1x128xf32>,
    %c4_i32 = arith.constant 4 : i32
    %25 = arith.addi %0, %c4_i32 : i32
    %26 = arith.index_cast %25 : i32 to index
    %27 = memref.load %arg1[%26] : memref<8xi32, #tpu.memory_space<smem>>
    %28 = arith.index_cast %27 : i32 to index
    %c0_8 = arith.constant 0 : index
    %29 = vector.load %arg2[%28, %c0_8] : memref<64x128xf32, #tpu.memory_space<vmem>>, vector<1x128xf32>
    %c4 = arith.constant 4 : index
    %c0_9 = arith.constant 0 : index
    %30 = vector.load %arg3[%c4, %c0_9] : memref<8x128xf32, #tpu.memory_space<vmem>>, vector<1x128xf32>
    tpu.vector_store %arg3[%c4, %c0_9], %29 {strides = array<i32>} : memref<8x128xf32, #tpu.memory_space<vmem>>, vector<1x128xf32>,
    %c5_i32 = arith.constant 5 : i32
    %31 = arith.addi %0, %c5_i32 : i32
    %32 = arith.index_cast %31 : i32 to index
    %33 = memref.load %arg1[%32] : memref<8xi32, #tpu.memory_space<smem>>
    %34 = arith.index_cast %33 : i32 to index
    %c0_10 = arith.constant 0 : index
    %35 = vector.load %arg2[%34, %c0_10] : memref<64x128xf32, #tpu.memory_space<vmem>>, vector<1x128xf32>
    %c5 = arith.constant 5 : index
    %c0_11 = arith.constant 0 : index
    %36 = vector.load %arg3[%c5, %c0_11] : memref<8x128xf32, #tpu.memory_space<vmem>>, vector<1x128xf32>
    tpu.vector_store %arg3[%c5, %c0_11], %35 {strides = array<i32>} : memref<8x128xf32, #tpu.memory_space<vmem>>, vector<1x128xf32>,
    %c6_i32 = arith.constant 6 : i32
    %37 = arith.addi %0, %c6_i32 : i32
    %38 = arith.index_cast %37 : i32 to index
    %39 = memref.load %arg1[%38] : memref<8xi32, #tpu.memory_space<smem>>
    %40 = arith.index_cast %39 : i32 to index
    %c0_12 = arith.constant 0 : index
    %41 = vector.load %arg2[%40, %c0_12] : memref<64x128xf32, #tpu.memory_space<vmem>>, vector<1x128xf32>
    %c6 = arith.constant 6 : index
    %c0_13 = arith.constant 0 : index
    %42 = vector.load %arg3[%c6, %c0_13] : memref<8x128xf32, #tpu.memory_space<vmem>>, vector<1x128xf32>
    tpu.vector_store %arg3[%c6, %c0_13], %41 {strides = array<i32>} : memref<8x128xf32, #tpu.memory_space<vmem>>, vector<1x128xf32>,
    %c7_i32 = arith.constant 7 : i32
    %43 = arith.addi %0, %c7_i32 : i32
    %44 = arith.index_cast %43 : i32 to index
    %45 = memref.load %arg1[%44] : memref<8xi32, #tpu.memory_space<smem>>
    %46 = arith.index_cast %45 : i32 to index
    %c0_14 = arith.constant 0 : index
    %47 = vector.load %arg2[%46, %c0_14] : memref<64x128xf32, #tpu.memory_space<vmem>>, vector<1x128xf32>
    %c7 = arith.constant 7 : index
    %c0_15 = arith.constant 0 : index
    %48 = vector.load %arg3[%c7, %c0_15] : memref<8x128xf32, #tpu.memory_space<vmem>>, vector<1x128xf32>
    tpu.vector_store %arg3[%c7, %c0_15], %47 {strides = array<i32>} : memref<8x128xf32, #tpu.memory_space<vmem>>, vector<1x128xf32>,
    return
  }
  func.func @transform_0(%arg0: i32, %arg1: memref<8xi32, #tpu.memory_space<smem>>) -> (i32, i32) {
    %c0_i32 = arith.constant 0 : i32
    %c0_i32_0 = arith.constant 0 : i32
    %c0_i32_1 = arith.constant 0 : i32
    return %c0_i32, %c0_i32_0 : i32, i32
  }
  func.func @transform_1(%arg0: i32, %arg1: memref<8xi32, #tpu.memory_space<smem>>) -> (i32, i32) {
    %c0_i32 = arith.constant 0 : i32
    %c0_i32_0 = arith.constant 0 : i32
    return %arg0, %c0_i32 : i32, i32
  }
}

</mosaic_0001>

<llo_original>
// kernel: tpu_custom_call.1
$region0: #{tpu_custom_call.1}
  #allocation0 [shape = 'u32[]', space=smem, size = 0x4, offset = 0x4, fixed_abs, tag = 'smem constant byte address 0x4 - core index']
  #allocation1 [shape = 'u32[144,128]{1,0:T(1,128)}', space=vmem, size = 0x12000, scoped, tag = 'internal scratch']
  #allocation2 [shape = 's32[1]{0}', space=sflag, size = 0x4, scoped, tag = 'scoped memory for tpu_custom_call.1']
  #allocation3 [shape = 'u8[512]{0}', space=smem, size = 0x200, scoped, tag = 'prefetched SMEM operand 0']
  %s0 = inlined_call_operand.hbm [shape: s32[8], index: 0, kind: input, shape index: {}]
  %s1 = inlined_call_operand.hbm [shape: f32[64,128], index: 1, kind: input, shape index: {}]
  %s2 = inlined_call_operand.hbm [shape: f32[8,128], index: 2, kind: output, shape index: {}]
  %s3 = sld [smem:[#allocation0]]
  $region18: #{tpu_custom_call.1} parent=0
    _
  %s5 = ssub.s32 1, %s3
  %s6 = scalar_select 0, %s5, %s3
  %8 = dma.hbm_to_smem %s0, 16, [#allocation3], [#allocation2]
  %9 = dma.done [#allocation2], 16
  %10 = sfence
  $region1: #{tpu_custom_call.1} parent=0
    #allocation4 [shape = 'u8[32768]{0}', space=vmem, size = 0x8000, scoped, tag = 'input window, operand 1, single buffered']
    #allocation5 [shape = 's32[1]{0}', space=sflag, size = 0x4, scoped, tag = 'scoped memory for tpu_custom_call.1']
    #allocation6 [shape = 's32[1]{0}', space=sflag, size = 0x4, scoped, tag = 'scoped memory for tpu_custom_call.1']
    #allocation7 [shape = 'u8[4096]{0}', space=vmem, size = 0x1000, scoped, tag = 'output window, operand 0, single buffered']
    %11 = vsyncpa [#allocation5], 0
    %12 = vsyncpa [#allocation6], 0
    // Predicated region
    $region2: #{tpu_custom_call.1} parent=1 // pred_check
      _
    $region3: #{tpu_custom_call.1} parent=1 // pred_check_branch
      %14 = sbr.rel (0) target = $region5
    $region4: #{tpu_custom_call.1} parent=1 // pred_region
      %s16 = ssub.s32 1024, 1024
      %17 = vsyncadd [#allocation5], %s16
      %s18 = sshll.u32 [#allocation4], 4
      %s19 = int_to_ptr.vmem [resolvable:$true] %s18
      %24 = dma.hbm_to_vmem [thread:$0]  %s1, 1024, %s19, [#allocation5], 128, 128, 8
    $region5: #{tpu_custom_call.1} parent=1 // pred_fallthru
      _
    // Predicated region
    $region6: #{tpu_custom_call.1} parent=1 // pred_check
      _
    $region7: #{tpu_custom_call.1} parent=1 // pred_check_branch
      %26 = sbr.rel (0) target = $region9
    $region8: #{tpu_custom_call.1} parent=1 // pred_region
      %27 = dma.done [#allocation5], 1024
    $region9: #{tpu_custom_call.1} parent=1 // pred_fallthru
      _
    %s28 = smul.u32 0, 8
    %s29 = sld [smem:[#allocation3 + %s28]]
    %s30 = scalar_lea.vmem [#allocation4], %s29
    %v31 = vld [vmem:[%s30] sm:$0x1]
    %32 = vst [vmem:[#allocation7] sm:$0x1] %v31
    %s33 = sadd.s32 %s28, 1
    %s34 = sld [smem:[#allocation3 + %s33]]
    %s35 = scalar_lea.vmem [#allocation4], %s34
    %v36 = vld [vmem:[%s35] sm:$0x1]
    %37 = vst [vmem:[#allocation7 + $0x1] sm:$0x1] %v36
    %s38 = sadd.s32 %s28, 2
    %s39 = sld [smem:[#allocation3 + %s38]]
    %s40 = scalar_lea.vmem [#allocation4], %s39
    %v41 = vld [vmem:[%s40] sm:$0x1]
    %42 = vst [vmem:[#allocation7 + $0x2] sm:$0x1] %v41
    %s43 = sadd.s32 %s28, 3
    %s44 = sld [smem:[#allocation3 + %s43]]
    %s45 = scalar_lea.vmem [#allocation4], %s44
    %v46 = vld [vmem:[%s45] sm:$0x1]
    %47 = vst [vmem:[#allocation7 + $0x3] sm:$0x1] %v46
    %s48 = sadd.s32 %s28, 4
    %s49 = sld [smem:[#allocation3 + %s48]]
    %s50 = scalar_lea.vmem [#allocation4], %s49
    %v51 = vld [vmem:[%s50] sm:$0x1]
    %52 = vst [vmem:[#allocation7 + $0x4] sm:$0x1] %v51
    %s53 = sadd.s32 %s28, 5
    %s54 = sld [smem:[#allocation3 + %s53]]
    %s55 = scalar_lea.vmem [#allocation4], %s54
    %v56 = vld [vmem:[%s55] sm:$0x1]
    %57 = vst [vmem:[#allocation7 + $0x5] sm:$0x1] %v56
    %s58 = sadd.s32 %s28, 6
    %s59 = sld [smem:[#allocation3 + %s58]]
    %s60 = scalar_lea.vmem [#allocation4], %s59
    %v61 = vld [vmem:[%s60] sm:$0x1]
    %62 = vst [vmem:[#allocation7 + $0x6] sm:$0x1] %v61
    %s63 = sadd.s32 %s28, 7
    %s64 = sld [smem:[#allocation3 + %s63]]
    %s65 = scalar_lea.vmem [#allocation4], %s64
    %v66 = vld [vmem:[%s65] sm:$0x1]
    %67 = vst [vmem:[#allocation7 + $0x7] sm:$0x1] %v66
    // Predicated region
    $region10: #{tpu_custom_call.1} parent=1 // pred_check
      _
    $region11: #{tpu_custom_call.1} parent=1 // pred_check_branch
      %69 = sbr.rel (0) target = $region13
    $region12: #{tpu_custom_call.1} parent=1 // pred_region
      %s71 = ssub.s32 128, 128
      %72 = vsyncadd [#allocation6], %s71
      %s74 = sshll.u32 [#allocation7], 4
      %s75 = int_to_ptr.vmem [resolvable:$true] %s74
      %77 = dma.vmem_to_hbm [thread:$0]  %s75, 128, %s2, [#allocation6]
    $region13: #{tpu_custom_call.1} parent=1 // pred_fallthru
      _
    // Predicated region
    $region14: #{tpu_custom_call.1} parent=1 // pred_check
      _
    $region15: #{tpu_custom_call.1} parent=1 // pred_check_branch
      %79 = sbr.rel (0) target = $region17
    $region16: #{tpu_custom_call.1} parent=1 // pred_region
      %80 = dma.done [#allocation6], 128
    $region17: #{tpu_custom_call.1} parent=1 // pred_fallthru
      _
    %81 = vsyncpa [#allocation5], 1
    %82 = vsyncpa [#allocation6], 1

</llo_original>
